<compile_context>
chip_gen: v7x
topology: tpu7x:2x2x1
jax: 0.10.0
libtpu: 0.0.40
codegen_flags: <defaults>
</compile_context>

<pallas_src>
import jax
import jax.numpy as jnp
from jax.experimental import pallas as pl
from jax.experimental.pallas import tpu as pltpu

LANE = 128
SUBLANE = 8


def _round_up(x, m):
    return ((x + m - 1) // m) * m


def make_generator_kernel(num_layers, leaky_slope=0.01, output_activation=None,
                          mxu_dtype=jnp.bfloat16):
    """Fused MLP body.

    refs: (x_ref, w_ref, b_ref, o_ref)
      x_ref: (tb, F)    mxu_dtype (already cast in the wrapper)
      w_ref: (L, F, F)  mxu_dtype, resident across grid steps
      b_ref: (L, 1, F)  f32, resident across grid steps
      o_ref: (tb, F)    out_dtype
    """
    def kernel(x_ref, w_ref, b_ref, o_ref):
        h = x_ref[...]                                   # bf16 feed to the MXU
        for i in range(num_layers):                      # statically unrolled
            acc = jnp.dot(h, w_ref[i],                   # (tb,F)@(F,F) -> f32
                          preferred_element_type=jnp.float32) + b_ref[i]
            if i + 1 != num_layers:
                # nn.LeakyReLU() default negative_slope = 0.01, kept in f32
                acc = jnp.where(acc > 0, acc, leaky_slope * acc)
                h = acc.astype(mxu_dtype)
            else:
                h = acc                                  # final layer stays f32
        if output_activation is not None:
            # must be elementwise (padded lanes are sliced off in the wrapper)
            h = output_activation(h)
        o_ref[...] = h.astype(o_ref.dtype)
    return kernel


def prepare_generator_params(params, latent_dim, mxu_dtype=jnp.bfloat16):
    """One-time padding/casting/stacking of parameters (hoist out of hot path).

    params: list of (W, b) with W: (in, out), b: (1, out) or (out,), f32.
    Returns (w_stack (L,F,F) mxu_dtype, b_stack (L,1,F) f32, F, out_dim).
    Zero padding to a uniform F is exact for Linear + LeakyReLU.
    """
    dims = [latent_dim] + [w.shape[1] for (w, _) in params]
    F = max(_round_up(d, LANE) for d in dims)
    L = len(params)
    w_stack = jnp.zeros((L, F, F), mxu_dtype)
    b_stack = jnp.zeros((L, 1, F), jnp.float32)
    for i, (w, b) in enumerate(params):
        din, dout = w.shape
        w_stack = w_stack.at[i, :din, :dout].set(w.astype(mxu_dtype))
        b_stack = b_stack.at[i, 0, :dout].set(
            jnp.reshape(b, (-1,)).astype(jnp.float32))
    return w_stack, b_stack, F, dims[-1]


def _default_num_cores():
    # v7x exposes 2 TensorCores per chip; v5e/v6e expose 1.
    try:
        return max(1, int(getattr(jax.devices()[0], "num_cores", 1) or 1))
    except Exception:
        return 1


def generator_forward(x, w_stack, b_stack, out_dim, output_activation=None, *,
                      mxu_dtype=jnp.bfloat16, out_dtype=jnp.float32,
                      block_batch=512, num_cores=None, slice_output=True):
    """Generator forward pass: one fused, batch-tiled pallas_call.

    x: (batch, latent_dim) float32 (or bf16)
    w_stack / b_stack / out_dim: from prepare_generator_params().
    """
    L, F, _ = w_stack.shape
    batch, latent_dim = x.shape

    if num_cores is None:
        num_cores = _default_num_cores()

    # ---- batch tile: >= num_cores grid steps (v7x megacore sharding), else
    # one max-size tile; tile is a multiple of 8 sublanes, capped by block_batch.
    b8 = _round_up(batch, SUBLANE)
    tb = max(SUBLANE, _round_up(-(-b8 // num_cores), SUBLANE))
    tb = min(tb, block_batch, b8)
    batch_pad = _round_up(batch, tb)

    # ---- single fused pad+cast pass over x: streamed operand is bf16 --------
    x_p = jnp.zeros((batch_pad, F), mxu_dtype).at[:batch, :latent_dim].set(
        x.astype(mxu_dtype))

    kernel = make_generator_kernel(L, 0.01, output_activation, mxu_dtype)

    out_padded = pl.pallas_call(
        kernel,
        out_shape=jax.ShapeDtypeStruct((batch_pad, F), out_dtype),
        grid_spec=pltpu.PrefetchScalarGridSpec(
            num_scalar_prefetch=0,
            grid=(batch_pad // tb,),
            in_specs=[
                # activations: tiled over batch, streamed per grid step
                pl.BlockSpec((tb, F), lambda i: (i, 0)),
                # stacked weights / biases: constant index_map -> resident
                pl.BlockSpec((L, F, F), lambda i: (0, 0, 0)),
                pl.BlockSpec((L, 1, F), lambda i: (0, 0, 0)),
            ],
            out_specs=pl.BlockSpec((tb, F), lambda i: (i, 0)),
        ),
        compiler_params=pltpu.CompilerParams(
            # batch tiles are independent -> shard across TensorCores on v7x;
            # neutral on single-TC v5e/v6e.
            dimension_semantics=("parallel",),
        ),
    )(x_p, w_stack, b_stack)

    if slice_output:
        # strip batch / lane padding (lane-dense unmasked store inside kernel)
        return out_padded[:batch, :out_dim]
    return out_padded


def init_generator_params(key, latent_dim, layers):
    """Deterministic init mimicking PyTorch nn.Linear default (U[-1/sqrt(fan_in), +])."""
    params = []
    last = latent_dim
    for width in layers:
        key, kw, kb = jax.random.split(key, 3)
        bound = 1.0 / jnp.sqrt(float(last))
        w = jax.random.uniform(kw, (last, width), jnp.float32, -bound, bound)
        b = jax.random.uniform(kb, (1, width), jnp.float32, -bound, bound)
        params.append((w, b))
        last = width
    return params


def generator_forward_ref(x, params, output_activation=None, mxu_dtype=None):
    """Pure-JAX reference. mxu_dtype=None -> full f32; otherwise emulates the
    kernel's bf16-matmul / f32-accumulate numerics."""
    n = len(params)
    if mxu_dtype is not None:
        h = x.astype(mxu_dtype)
    else:
        h = x.astype(jnp.float32)
    for i, (w, b) in enumerate(params):
        if mxu_dtype is not None:
            h = jnp.dot(h, w.astype(mxu_dtype),
                        preferred_element_type=jnp.float32)
        else:
            h = jnp.dot(h, w, preferred_element_type=jnp.float32)
        h = h + b.astype(jnp.float32)
        if i + 1 != n:
            h = jnp.where(h > 0, h, 0.01 * h)
            if mxu_dtype is not None:
                h = h.astype(mxu_dtype).astype(jnp.float32)
            if mxu_dtype is not None:
                h = h.astype(mxu_dtype)
    if output_activation is not None:
        h = output_activation(h)
    return h.astype(jnp.float32)


if __name__ == "__main__":
    key = jax.random.PRNGKey(0)
    key, kx = jax.random.split(key)

    batch = 256                      # padded-free batch; tiles across TCs on v7x
    latent_dim = 32
    layers = [64, 48, 16]            # hidden widths + output width
    output_activation = None         # matches Generator(..., output_activation=None)

    x = jax.random.normal(kx, (batch, latent_dim), jnp.float32)
    params = init_generator_params(key, latent_dim, layers)

    # one-time parameter prep (pad + cast + stack), outside the hot path
    w_stack, b_stack, F, out_dim = prepare_generator_params(params, latent_dim)

    out = generator_forward(x, w_stack, b_stack, out_dim, output_activation)
    out = jax.block_until_ready(out)
    assert out.shape == (batch, layers[-1])

    # strict check vs a reference using the same bf16-matmul / f32-acc numerics
    ref_bf16 = generator_forward_ref(x, params, output_activation,
                                     mxu_dtype=jnp.bfloat16)
    assert jnp.allclose(out, ref_bf16, atol=1e-3, rtol=1e-3), \
        "mismatch vs bf16-matched reference"

    # loose sanity check vs the full-f32 PyTorch-equivalent forward
    ref_f32 = generator_forward_ref(x, params, output_activation)
    assert jnp.allclose(out, ref_f32, atol=1e-1, rtol=1e-1), \
        "mismatch vs f32 reference (beyond bf16 tolerance)"

    print("KERNEL_OK")
</pallas_src>

<mosaic_0001>
module attributes {stable_mosaic.version = 11 : i64} {
  func.func @kernel(%arg0: i32, %arg1: memref<256x128xbf16, #tpu.memory_space<vmem>>, %arg2: memref<3x128x128xbf16, #tpu.memory_space<vmem>>, %arg3: memref<3x1x128xf32, #tpu.memory_space<vmem>>, %arg4: memref<256x128xf32, #tpu.memory_space<vmem>>) attributes {dimension_semantics = [#tpu.dimension_semantics<parallel>], iteration_bounds = array<i64: 1>, scalar_prefetch = 0 : i64, scratch_operands = 0 : i64, tpu.core_type = #tpu.core_type<tc>, window_params = [{transform_indices = @transform_0, window_bounds = array<i64: 256, 128>}, {pipeline_mode = #tpu.pipeline_mode<synchronous>, transform_indices = @transform_1, window_bounds = array<i64: 3, 128, 128>}, {pipeline_mode = #tpu.pipeline_mode<synchronous>, transform_indices = @transform_2, window_bounds = array<i64: 3, 1, 128>}, {transform_indices = @transform_3, window_bounds = array<i64: 256, 128>}]} {
    %c0 = arith.constant 0 : index
    %c0_0 = arith.constant 0 : index
    %0 = vector.load %arg1[%c0, %c0_0] : memref<256x128xbf16, #tpu.memory_space<vmem>>, vector<256x128xbf16>
    %c0_1 = arith.constant 0 : index
    %c0_2 = arith.constant 0 : index
    %c0_3 = arith.constant 0 : index
    %1 = vector.load %arg2[%c0_1, %c0_2, %c0_3] : memref<3x128x128xbf16, #tpu.memory_space<vmem>>, vector<1x128x128xbf16>
    %2 = vector.shape_cast %1 : vector<1x128x128xbf16> to vector<128x128xbf16>
    %cst = arith.constant dense<0.000000e+00> : vector<256x128xf32>
    %3 = tpu.matmul %0, %2, %cst {dimension_numbers = #tpu.dot_dimension_numbers<[1], [0], [0], [1], [0, 0, 1, 1], [], []>} : vector<256x128xbf16>, vector<128x128xbf16>, vector<256x128xf32> -> vector<256x128xf32>
    %c0_4 = arith.constant 0 : index
    %c0_5 = arith.constant 0 : index
    %c0_6 = arith.constant 0 : index
    %4 = vector.load %arg3[%c0_4, %c0_5, %c0_6] : memref<3x1x128xf32, #tpu.memory_space<vmem>>, vector<1x1x128xf32>
    %5 = vector.shape_cast %4 : vector<1x1x128xf32> to vector<1x128xf32>
    %6 = vector.broadcast %5 : vector<1x128xf32> to vector<256x128xf32>
    %7 = arith.addf %3, %6 : vector<256x128xf32>
    %cst_7 = arith.constant 0.000000e+00 : f32
    %8 = vector.broadcast %cst_7 : f32 to vector<256x128xf32>
    %9 = arith.cmpf ogt, %7, %8 : vector<256x128xf32>
    %cst_8 = arith.constant 0.00999999977 : f32
    %10 = vector.broadcast %cst_8 : f32 to vector<256x128xf32>
    %11 = arith.mulf %10, %7 : vector<256x128xf32>
    %12 = arith.select %9, %7, %11 : vector<256x128xi1>, vector<256x128xf32>
    %13 = arith.truncf %12 : vector<256x128xf32> to vector<256x128xbf16>
    %c1 = arith.constant 1 : index
    %c0_9 = arith.constant 0 : index
    %c0_10 = arith.constant 0 : index
    %14 = vector.load %arg2[%c1, %c0_9, %c0_10] : memref<3x128x128xbf16, #tpu.memory_space<vmem>>, vector<1x128x128xbf16>
    %15 = vector.shape_cast %14 : vector<1x128x128xbf16> to vector<128x128xbf16>
    %cst_11 = arith.constant dense<0.000000e+00> : vector<256x128xf32>
    %16 = tpu.matmul %13, %15, %cst_11 {dimension_numbers = #tpu.dot_dimension_numbers<[1], [0], [0], [1], [0, 0, 1, 1], [], []>} : vector<256x128xbf16>, vector<128x128xbf16>, vector<256x128xf32> -> vector<256x128xf32>
    %c1_12 = arith.constant 1 : index
    %c0_13 = arith.constant 0 : index
    %c0_14 = arith.constant 0 : index
    %17 = vector.load %arg3[%c1_12, %c0_13, %c0_14] : memref<3x1x128xf32, #tpu.memory_space<vmem>>, vector<1x1x128xf32>
    %18 = vector.shape_cast %17 : vector<1x1x128xf32> to vector<1x128xf32>
    %19 = vector.broadcast %18 : vector<1x128xf32> to vector<256x128xf32>
    %20 = arith.addf %16, %19 : vector<256x128xf32>
    %cst_15 = arith.constant 0.000000e+00 : f32
    %21 = vector.broadcast %cst_15 : f32 to vector<256x128xf32>
    %22 = arith.cmpf ogt, %20, %21 : vector<256x128xf32>
    %cst_16 = arith.constant 0.00999999977 : f32
    %23 = vector.broadcast %cst_16 : f32 to vector<256x128xf32>
    %24 = arith.mulf %23, %20 : vector<256x128xf32>
    %25 = arith.select %22, %20, %24 : vector<256x128xi1>, vector<256x128xf32>
    %26 = arith.truncf %25 : vector<256x128xf32> to vector<256x128xbf16>
    %c2 = arith.constant 2 : index
    %c0_17 = arith.constant 0 : index
    %c0_18 = arith.constant 0 : index
    %27 = vector.load %arg2[%c2, %c0_17, %c0_18] : memref<3x128x128xbf16, #tpu.memory_space<vmem>>, vector<1x128x128xbf16>
    %28 = vector.shape_cast %27 : vector<1x128x128xbf16> to vector<128x128xbf16>
    %cst_19 = arith.constant dense<0.000000e+00> : vector<256x128xf32>
    %29 = tpu.matmul %26, %28, %cst_19 {dimension_numbers = #tpu.dot_dimension_numbers<[1], [0], [0], [1], [0, 0, 1, 1], [], []>} : vector<256x128xbf16>, vector<128x128xbf16>, vector<256x128xf32> -> vector<256x128xf32>
    %c2_20 = arith.constant 2 : index
    %c0_21 = arith.constant 0 : index
    %c0_22 = arith.constant 0 : index
    %30 = vector.load %arg3[%c2_20, %c0_21, %c0_22] : memref<3x1x128xf32, #tpu.memory_space<vmem>>, vector<1x1x128xf32>
    %31 = vector.shape_cast %30 : vector<1x1x128xf32> to vector<1x128xf32>
    %32 = vector.broadcast %31 : vector<1x128xf32> to vector<256x128xf32>
    %33 = arith.addf %29, %32 : vector<256x128xf32>
    %c0_23 = arith.constant 0 : index
    %c0_24 = arith.constant 0 : index
    %34 = vector.load %arg4[%c0_23, %c0_24] : memref<256x128xf32, #tpu.memory_space<vmem>>, vector<256x128xf32>
    tpu.vector_store %arg4[%c0_23, %c0_24], %33 {strides = array<i32>} : memref<256x128xf32, #tpu.memory_space<vmem>>, vector<256x128xf32>,
    return
  }
  func.func @transform_0(%arg0: i32) -> (i32, i32) {
    %c0_i32 = arith.constant 0 : i32
    %c0_i32_0 = arith.constant 0 : i32
    return %arg0, %c0_i32 : i32, i32
  }
  func.func @transform_1(%arg0: i32) -> (i32, i32, i32) {
    %c0_i32 = arith.constant 0 : i32
    %c0_i32_0 = arith.constant 0 : i32
    %c0_i32_1 = arith.constant 0 : i32
    %c0_i32_2 = arith.constant 0 : i32
    return %c0_i32, %c0_i32_0, %c0_i32_1 : i32, i32, i32
  }
  func.func @transform_2(%arg0: i32) -> (i32, i32, i32) {
    %c0_i32 = arith.constant 0 : i32
    %c0_i32_0 = arith.constant 0 : i32
    %c0_i32_1 = arith.constant 0 : i32
    %c0_i32_2 = arith.constant 0 : i32
    return %c0_i32, %c0_i32_0, %c0_i32_1 : i32, i32, i32
  }
  func.func @transform_3(%arg0: i32) -> (i32, i32) {
    %c0_i32 = arith.constant 0 : i32
    %c0_i32_0 = arith.constant 0 : i32
    return %arg0, %c0_i32 : i32, i32
  }
}

</mosaic_0001>

<llo_original>
// kernel: tpu_custom_call.1
$region0: #{tpu_custom_call.1}
  #allocation0 [shape = 'u32[]', space=smem, size = 0x4, offset = 0x4, fixed_abs, tag = 'smem constant byte address 0x4 - core index']
  #allocation1 [shape = 'u32[144,128]{1,0:T(1,128)}', space=vmem, size = 0x12000, scoped, tag = 'internal scratch']
  %s0 = inlined_call_operand.hbm [shape: bf16[256,128], index: 0, kind: input, shape index: {}]
  %s1 = inlined_call_operand.hbm [shape: bf16[3,128,128], index: 1, kind: input, shape index: {}]
  %s2 = inlined_call_operand.vmem [shape: f32[3,1,128], index: 2, kind: input, shape index: {}]
  %s3 = inlined_call_operand.hbm [shape: f32[256,128], index: 3, kind: output, shape index: {}]
  %s4 = sld [smem:[#allocation0]]
  $region30: #{tpu_custom_call.1} parent=0
    _
  %s6 = ssub.s32 1, %s4
  %s7 = scalar_select 0, %s6, %s4
  $region1: #{tpu_custom_call.1} parent=0
    #allocation2 [shape = 'u8[65536]{0}', space=vmem, size = 0x10000, scoped, tag = 'input window, operand 0, single buffered']
    #allocation3 [shape = 's32[1]{0}', space=sflag, size = 0x4, scoped, tag = 'scoped memory for tpu_custom_call.1']
    #allocation4 [shape = 's32[1]{0}', space=sflag, size = 0x4, scoped, tag = 'scoped memory for tpu_custom_call.1']
    #allocation5 [shape = 'u8[98304]{0}', space=vmem, size = 0x18000, scoped, tag = 'input window, operand 1, single buffered']
    #allocation6 [shape = 's32[1]{0}', space=sflag, size = 0x4, scoped, tag = 'scoped memory for tpu_custom_call.1']
    #allocation7 [shape = 'u8[131072]{0}', space=vmem, size = 0x20000, scoped, tag = 'output window, operand 0, single buffered']
    %8 = vsyncpa [#allocation3], 0
    %9 = vsyncpa [#allocation6], 0
    %10 = vsyncpa [#allocation4], 0
    // Predicated region
    $region2: #{tpu_custom_call.1} parent=1 // pred_check
      _
    $region3: #{tpu_custom_call.1} parent=1 // pred_check_branch
      %12 = sbr.rel (0) target = $region5
    $region4: #{tpu_custom_call.1} parent=1 // pred_region
      %s14 = ssub.s32 2048, 2048
      %15 = vsyncadd [#allocation3], %s14
      %s16 = sshll.u32 [#allocation2], 4
      %s17 = int_to_ptr.vmem [resolvable:$true] %s16
      %22 = dma.hbm_to_vmem [thread:$0]  %s0, 2048, %s17, [#allocation3], 64, 64, 4
    $region5: #{tpu_custom_call.1} parent=1 // pred_fallthru
      _
    // Predicated region
    $region6: #{tpu_custom_call.1} parent=1 // pred_check
      _
    $region7: #{tpu_custom_call.1} parent=1 // pred_check_branch
      %24 = sbr.rel (0) target = $region9
    $region8: #{tpu_custom_call.1} parent=1 // pred_region
      %s26 = ssub.s32 3072, 3072
      %27 = vsyncadd [#allocation6], %s26
      %s28 = sshll.u32 [#allocation5], 4
      %s29 = int_to_ptr.vmem [resolvable:$true] %s28
      %34 = dma.hbm_to_vmem [thread:$0]  %s1, 3072, %s29, [#allocation6], 64, 64, 4
    $region9: #{tpu_custom_call.1} parent=1 // pred_fallthru
      _
    // Predicated region
    $region10: #{tpu_custom_call.1} parent=1 // pred_check
      _
    $region11: #{tpu_custom_call.1} parent=1 // pred_check_branch
      %36 = sbr.rel (0) target = $region13
    $region12: #{tpu_custom_call.1} parent=1 // pred_region
      _
    $region13: #{tpu_custom_call.1} parent=1 // pred_fallthru
      _
    // Predicated region
    $region14: #{tpu_custom_call.1} parent=1 // pred_check
      _
    $region15: #{tpu_custom_call.1} parent=1 // pred_check_branch
      %38 = sbr.rel (0) target = $region17
    $region16: #{tpu_custom_call.1} parent=1 // pred_region
      %39 = dma.done [#allocation3], 2048
    $region17: #{tpu_custom_call.1} parent=1 // pred_fallthru
      _
    // Predicated region
    $region18: #{tpu_custom_call.1} parent=1 // pred_check
      _
    $region19: #{tpu_custom_call.1} parent=1 // pred_check_branch
      %41 = sbr.rel (0) target = $region21
    $region20: #{tpu_custom_call.1} parent=1 // pred_region
      %42 = dma.done [#allocation6], 3072
    $region21: #{tpu_custom_call.1} parent=1 // pred_fallthru
      _
    %v44 = vld [vmem:[#allocation2] sm:$0xf]
    %v45 = vld [vmem:[#allocation2 + $0x4] sm:$0xf]
    %v46 = vld [vmem:[#allocation2 + $0x8] sm:$0xf]
    %v47 = vld [vmem:[#allocation2 + $0xc] sm:$0xf]
    %v48 = vld [vmem:[#allocation2 + $0x10] sm:$0xf]
    %v49 = vld [vmem:[#allocation2 + $0x14] sm:$0xf]
    %v50 = vld [vmem:[#allocation2 + $0x18] sm:$0xf]
    %v51 = vld [vmem:[#allocation2 + $0x1c] sm:$0xf]
    %v52 = vld [vmem:[#allocation2 + $0x20] sm:$0xf]
    %v53 = vld [vmem:[#allocation2 + $0x24] sm:$0xf]
    %v54 = vld [vmem:[#allocation2 + $0x28] sm:$0xf]
    %v55 = vld [vmem:[#allocation2 + $0x2c] sm:$0xf]
    %v56 = vld [vmem:[#allocation2 + $0x30] sm:$0xf]
    %v57 = vld [vmem:[#allocation2 + $0x34] sm:$0xf]
    %v58 = vld [vmem:[#allocation2 + $0x38] sm:$0xf]
    %v59 = vld [vmem:[#allocation2 + $0x3c] sm:$0xf]
    %v60 = vld [vmem:[#allocation2 + $0x40] sm:$0xf]
    %v61 = vld [vmem:[#allocation2 + $0x44] sm:$0xf]
    %v62 = vld [vmem:[#allocation2 + $0x48] sm:$0xf]
    %v63 = vld [vmem:[#allocation2 + $0x4c] sm:$0xf]
    %v64 = vld [vmem:[#allocation2 + $0x50] sm:$0xf]
    %v65 = vld [vmem:[#allocation2 + $0x54] sm:$0xf]
    %v66 = vld [vmem:[#allocation2 + $0x58] sm:$0xf]
    %v67 = vld [vmem:[#allocation2 + $0x5c] sm:$0xf]
    %v68 = vld [vmem:[#allocation2 + $0x60] sm:$0xf]
    %v69 = vld [vmem:[#allocation2 + $0x64] sm:$0xf]
    %v70 = vld [vmem:[#allocation2 + $0x68] sm:$0xf]
    %v71 = vld [vmem:[#allocation2 + $0x6c] sm:$0xf]
    %v72 = vld [vmem:[#allocation2 + $0x70] sm:$0xf]
    %v73 = vld [vmem:[#allocation2 + $0x74] sm:$0xf]
    %v74 = vld [vmem:[#allocation2 + $0x78] sm:$0xf]
    %v75 = vld [vmem:[#allocation2 + $0x7c] sm:$0xf]
    %v76 = vld [vmem:[#allocation5] sm:$0xf]
    %v77 = vld [vmem:[#allocation5 + $0x4] sm:$0xf]
    %v78 = vld [vmem:[#allocation5 + $0x8] sm:$0xf]
    %v79 = vld [vmem:[#allocation5 + $0xc] sm:$0xf]
    %v80 = vld [vmem:[#allocation5 + $0x10] sm:$0xf]
    %v81 = vld [vmem:[#allocation5 + $0x14] sm:$0xf]
    %v82 = vld [vmem:[#allocation5 + $0x18] sm:$0xf]
    %v83 = vld [vmem:[#allocation5 + $0x1c] sm:$0xf]
    %v84 = vld [vmem:[#allocation5 + $0x20] sm:$0xf]
    %v85 = vld [vmem:[#allocation5 + $0x24] sm:$0xf]
    %v86 = vld [vmem:[#allocation5 + $0x28] sm:$0xf]
    %v87 = vld [vmem:[#allocation5 + $0x2c] sm:$0xf]
    %v88 = vld [vmem:[#allocation5 + $0x30] sm:$0xf]
    %v89 = vld [vmem:[#allocation5 + $0x34] sm:$0xf]
    %v90 = vld [vmem:[#allocation5 + $0x38] sm:$0xf]
    %v91 = vld [vmem:[#allocation5 + $0x3c] sm:$0xf]
    %v92 = vld [vmem:[%s2] sm:$0x1]
    %v94 = vlaneseq
    %v95 = vshrl.u32 %v94, 7
    %v96 = vsub.s32 0, %v95
    %v97 = vrot.slane %v92, %v96
    %v131 = vunpack.c.l.b16 %v44
    %v132 = vunpack.c.l.b16 %v45
    %v133 = vunpack.c.l.b16 %v46
    %v134 = vunpack.c.l.b16 %v47
    %v135 = vunpack.c.l.b16 %v48
    %v136 = vunpack.c.l.b16 %v49
    %v137 = vunpack.c.l.b16 %v50
    %v138 = vunpack.c.l.b16 %v51
    %v139 = vunpack.c.l.b16 %v52
    %v140 = vunpack.c.l.b16 %v53
    %v141 = vunpack.c.l.b16 %v54
    %v142 = vunpack.c.l.b16 %v55
    %v143 = vunpack.c.l.b16 %v56
    %v144 = vunpack.c.l.b16 %v57
    %v145 = vunpack.c.l.b16 %v58
    %v146 = vunpack.c.l.b16 %v59
    %v147 = vunpack.c.l.b16 %v60
    %v148 = vunpack.c.l.b16 %v61
    %v149 = vunpack.c.l.b16 %v62
    %v150 = vunpack.c.l.b16 %v63
    %v151 = vunpack.c.l.b16 %v64
    %v152 = vunpack.c.l.b16 %v65
    %v153 = vunpack.c.l.b16 %v66
    %v154 = vunpack.c.l.b16 %v67
    %v155 = vunpack.c.l.b16 %v68
    %v156 = vunpack.c.l.b16 %v69
    %v157 = vunpack.c.l.b16 %v70
    %v158 = vunpack.c.l.b16 %v71
    %v159 = vunpack.c.l.b16 %v72
    %v160 = vunpack.c.l.b16 %v73
    %v161 = vunpack.c.l.b16 %v74
    %v162 = vunpack.c.l.b16 %v75
    %v163 = vpack.c.b16 %v132, %v131
    %v164 = vpack.c.b16 %v134, %v133
    %v165 = vpack.c.b16 %v136, %v135
    %v166 = vpack.c.b16 %v138, %v137
    %v167 = vpack.c.b16 %v140, %v139
    %v168 = vpack.c.b16 %v142, %v141
    %v169 = vpack.c.b16 %v144, %v143
    %v170 = vpack.c.b16 %v146, %v145
    %v171 = vpack.c.b16 %v148, %v147
    %v172 = vpack.c.b16 %v150, %v149
    %v173 = vpack.c.b16 %v152, %v151
    %v174 = vpack.c.b16 %v154, %v153
    %v175 = vpack.c.b16 %v156, %v155
    %v176 = vpack.c.b16 %v158, %v157
    %v177 = vpack.c.b16 %v160, %v159
    %v178 = vpack.c.b16 %v162, %v161
    %v211 = vunpack.c.l.b16 %v76
    %v212 = vunpack.c.l.b16 %v77
    %v213 = vunpack.c.l.b16 %v78
    %v214 = vunpack.c.l.b16 %v79
    %v215 = vunpack.c.l.b16 %v80
    %v216 = vunpack.c.l.b16 %v81
    %v217 = vunpack.c.l.b16 %v82
    %v218 = vunpack.c.l.b16 %v83
    %v219 = vunpack.c.l.b16 %v84
    %v220 = vunpack.c.l.b16 %v85
    %v221 = vunpack.c.l.b16 %v86
    %v222 = vunpack.c.l.b16 %v87
    %v223 = vunpack.c.l.b16 %v88
    %v224 = vunpack.c.l.b16 %v89
    %v225 = vunpack.c.l.b16 %v90
    %v226 = vunpack.c.l.b16 %v91
    %v227 = vpack.c.b16 %v212, %v211
    %v228 = vpack.c.b16 %v214, %v213
    %v229 = vpack.c.b16 %v216, %v215
    %v230 = vpack.c.b16 %v218, %v217
    %v231 = vpack.c.b16 %v220, %v219
    %v232 = vpack.c.b16 %v222, %v221
    %v233 = vpack.c.b16 %v224, %v223
    %v234 = vpack.c.b16 %v226, %v225
    %243 = vmatprep.subr.bf16.mxu0 0
    %244 = vmatpush1.bf16.msra.mxu0 %v227
    %245 = vmatprep.subr.bf16.mxu0 0
    %246 = vmatpush1.bf16.msra.mxu0 %v228
    %247 = vmatprep.subr.bf16.mxu0 0
    %248 = vmatpush1.bf16.msra.mxu0 %v229
    %249 = vmatprep.subr.bf16.mxu0 0
    %250 = vmatpush1.bf16.msra.mxu0 %v230
    %251 = vmatprep.subr.bf16.mxu0 0
    %252 = vmatpush1.bf16.msra.mxu0 %v231
    %253 = vmatprep.subr.bf16.mxu0 0
    %254 = vmatpush1.bf16.msra.mxu0 %v232
    %255 = vmatprep.subr.bf16.mxu0 0
    %256 = vmatpush1.bf16.msra.mxu0 %v233
    %257 = vmatprep.subr.bf16.mxu0 0
    %258 = vmatpush1.bf16.msra.mxu0 %v234
    %259 = vmatprep.subr.bf16.mxu0 0
    %260 = vmatpush1.bf16.msra.mxu0 0
    %261 = vmatprep.subr.bf16.mxu0 0
    %262 = vmatpush1.bf16.msra.mxu0 0
    %263 = vmatprep.subr.bf16.mxu0 0
    %264 = vmatpush1.bf16.msra.mxu0 0
    %265 = vmatprep.subr.bf16.mxu0 0
    %266 = vmatpush1.bf16.msra.mxu0 0
    %267 = vmatprep.subr.bf16.mxu0 0
    %268 = vmatpush1.bf16.msra.mxu0 0
    %269 = vmatprep.subr.bf16.mxu0 0
    %270 = vmatpush1.bf16.msra.mxu0 0
    %271 = vmatprep.subr.bf16.mxu0 0
    %272 = vmatpush1.bf16.msra.mxu0 0
    %273 = vmatprep.subr.bf16.mxu0 0
    %274 = vmatpush1.bf16.msra.mxu0 0
    %275 = vmatprep.mubr.bf16.mxu0 0
    %276 = vmatmul.mubr.bf16.gmra.mrb[0].mxu0 %v163
    %v277 = vpop.f32.mrb[0].mxu0
    %v278 = vadd.f32 %v97, %v277
    %v279 = vpop.f32.mrb[0].mxu0
    %v280 = vpop.f32.mrb[0].mxu0
    %v281 = vadd.f32 %v97, %v280
    %v282 = vpop.f32.mrb[0].mxu0
    %283 = vmatprep.mubr.bf16.mxu0 0
    %284 = vmatmul.mubr.bf16.gmra.mrb[0].mxu0 %v164
    %v285 = vpop.f32.mrb[0].mxu0
    %v286 = vadd.f32 %v97, %v285
    %v287 = vpop.f32.mrb[0].mxu0
    %v288 = vpop.f32.mrb[0].mxu0
    %v289 = vadd.f32 %v97, %v288
    %v290 = vpop.f32.mrb[0].mxu0
    %291 = vmatprep.mubr.bf16.mxu0 0
    %292 = vmatmul.mubr.bf16.gmra.mrb[0].mxu0 %v165
    %v293 = vpop.f32.mrb[0].mxu0
    %v294 = vadd.f32 %v97, %v293
    %v295 = vpop.f32.mrb[0].mxu0
    %v296 = vpop.f32.mrb[0].mxu0
    %v297 = vadd.f32 %v97, %v296
    %v298 = vpop.f32.mrb[0].mxu0
    %299 = vmatprep.mubr.bf16.mxu0 0
    %300 = vmatmul.mubr.bf16.gmra.mrb[0].mxu0 %v166
    %v301 = vpop.f32.mrb[0].mxu0
    %v302 = vadd.f32 %v97, %v301
    %v303 = vpop.f32.mrb[0].mxu0
    %v304 = vpop.f32.mrb[0].mxu0
    %v305 = vadd.f32 %v97, %v304
    %v306 = vpop.f32.mrb[0].mxu0
    %307 = vmatprep.mubr.bf16.mxu0 0
    %308 = vmatmul.mubr.bf16.gmra.mrb[0].mxu0 %v167
    %v309 = vpop.f32.mrb[0].mxu0
    %v310 = vadd.f32 %v97, %v309
    %v311 = vpop.f32.mrb[0].mxu0
    %v312 = vpop.f32.mrb[0].mxu0
    %v313 = vadd.f32 %v97, %v312
    %v314 = vpop.f32.mrb[0].mxu0
    %315 = vmatprep.mubr.bf16.mxu0 0
    %316 = vmatmul.mubr.bf16.gmra.mrb[0].mxu0 %v168
    %v317 = vpop.f32.mrb[0].mxu0
    %v318 = vadd.f32 %v97, %v317
    %v319 = vpop.f32.mrb[0].mxu0
    %v320 = vpop.f32.mrb[0].mxu0
    %v321 = vadd.f32 %v97, %v320
    %v322 = vpop.f32.mrb[0].mxu0
    %323 = vmatprep.mubr.bf16.mxu0 0
    %324 = vmatmul.mubr.bf16.gmra.mrb[0].mxu0 %v169
    %v325 = vpop.f32.mrb[0].mxu0
    %v326 = vadd.f32 %v97, %v325
    %v327 = vpop.f32.mrb[0].mxu0
    %v328 = vpop.f32.mrb[0].mxu0
    %v329 = vadd.f32 %v97, %v328
    %v330 = vpop.f32.mrb[0].mxu0
    %331 = vmatprep.mubr.bf16.mxu0 0
    %332 = vmatmul.mubr.bf16.gmra.mrb[0].mxu0 %v170
    %v333 = vpop.f32.mrb[0].mxu0
    %v334 = vadd.f32 %v97, %v333
    %v335 = vpop.f32.mrb[0].mxu0
    %v336 = vpop.f32.mrb[0].mxu0
    %v337 = vadd.f32 %v97, %v336
    %v338 = vpop.f32.mrb[0].mxu0
    %339 = vmatprep.mubr.bf16.mxu0 0
    %340 = vmatmul.mubr.bf16.gmra.mrb[0].mxu0 %v171
    %v341 = vpop.f32.mrb[0].mxu0
    %v342 = vadd.f32 %v97, %v341
    %v343 = vpop.f32.mrb[0].mxu0
    %v344 = vpop.f32.mrb[0].mxu0
    %v345 = vadd.f32 %v97, %v344
    %v346 = vpop.f32.mrb[0].mxu0
    %347 = vmatprep.mubr.bf16.mxu0 0
    %348 = vmatmul.mubr.bf16.gmra.mrb[0].mxu0 %v172
    %v349 = vpop.f32.mrb[0].mxu0
    %v350 = vadd.f32 %v97, %v349
    %v351 = vpop.f32.mrb[0].mxu0
    %v352 = vpop.f32.mrb[0].mxu0
    %v353 = vadd.f32 %v97, %v352
    %v354 = vpop.f32.mrb[0].mxu0
    %355 = vmatprep.mubr.bf16.mxu0 0
    %356 = vmatmul.mubr.bf16.gmra.mrb[0].mxu0 %v173
    %v357 = vpop.f32.mrb[0].mxu0
    %v358 = vadd.f32 %v97, %v357
    %v359 = vpop.f32.mrb[0].mxu0
    %v360 = vpop.f32.mrb[0].mxu0
    %v361 = vadd.f32 %v97, %v360
    %v362 = vpop.f32.mrb[0].mxu0
    %363 = vmatprep.mubr.bf16.mxu0 0
    %364 = vmatmul.mubr.bf16.gmra.mrb[0].mxu0 %v174
    %v365 = vpop.f32.mrb[0].mxu0
    %v366 = vadd.f32 %v97, %v365
    %v367 = vpop.f32.mrb[0].mxu0
    %v368 = vpop.f32.mrb[0].mxu0
    %v369 = vadd.f32 %v97, %v368
    %v370 = vpop.f32.mrb[0].mxu0
    %371 = vmatprep.mubr.bf16.mxu0 0
    %372 = vmatmul.mubr.bf16.gmra.mrb[0].mxu0 %v175
    %v373 = vpop.f32.mrb[0].mxu0
    %v374 = vadd.f32 %v97, %v373
    %v375 = vpop.f32.mrb[0].mxu0
    %v376 = vpop.f32.mrb[0].mxu0
    %v377 = vadd.f32 %v97, %v376
    %v378 = vpop.f32.mrb[0].mxu0
    %379 = vmatprep.mubr.bf16.mxu0 0
    %380 = vmatmul.mubr.bf16.gmra.mrb[0].mxu0 %v176
    %v381 = vpop.f32.mrb[0].mxu0
    %v382 = vadd.f32 %v97, %v381
    %v383 = vpop.f32.mrb[0].mxu0
    %v384 = vpop.f32.mrb[0].mxu0
    %v385 = vadd.f32 %v97, %v384
    %v386 = vpop.f32.mrb[0].mxu0
    %387 = vmatprep.mubr.bf16.mxu0 0
    %388 = vmatmul.mubr.bf16.gmra.mrb[0].mxu0 %v177
    %v389 = vpop.f32.mrb[0].mxu0
    %v390 = vadd.f32 %v97, %v389
    %v391 = vpop.f32.mrb[0].mxu0
    %v392 = vpop.f32.mrb[0].mxu0
    %v393 = vadd.f32 %v97, %v392
    %v394 = vpop.f32.mrb[0].mxu0
    %395 = vmatprep.mubr.bf16.mxu0 0
    %396 = vmatmul.mubr.bf16.gmra.mrb[0].mxu0 %v178
    %v397 = vpop.f32.mrb[0].mxu0
    %v398 = vadd.f32 %v97, %v397
    %v399 = vpop.f32.mrb[0].mxu0
    %v400 = vpop.f32.mrb[0].mxu0
    %v401 = vadd.f32 %v97, %v400
    %v402 = vpop.f32.mrb[0].mxu0
    %403 = vdwg.mxu0
    %vm404 = vcmp.gt.f32.partialorder %v278, 0.0
    %vm405 = vcmp.gt.f32.partialorder %v281, 0.0
    %vm406 = vcmp.gt.f32.partialorder %v286, 0.0
    %vm407 = vcmp.gt.f32.partialorder %v289, 0.0
    %vm408 = vcmp.gt.f32.partialorder %v294, 0.0
    %vm409 = vcmp.gt.f32.partialorder %v297, 0.0
    %vm410 = vcmp.gt.f32.partialorder %v302, 0.0
    %vm411 = vcmp.gt.f32.partialorder %v305, 0.0
    %vm412 = vcmp.gt.f32.partialorder %v310, 0.0
    %vm413 = vcmp.gt.f32.partialorder %v313, 0.0
    %vm414 = vcmp.gt.f32.partialorder %v318, 0.0
    %vm415 = vcmp.gt.f32.partialorder %v321, 0.0
    %vm416 = vcmp.gt.f32.partialorder %v326, 0.0
    %vm417 = vcmp.gt.f32.partialorder %v329, 0.0
    %vm418 = vcmp.gt.f32.partialorder %v334, 0.0
    %vm419 = vcmp.gt.f32.partialorder %v337, 0.0
    %vm420 = vcmp.gt.f32.partialorder %v342, 0.0
    %vm421 = vcmp.gt.f32.partialorder %v345, 0.0
    %vm422 = vcmp.gt.f32.partialorder %v350, 0.0
    %vm423 = vcmp.gt.f32.partialorder %v353, 0.0
    %vm424 = vcmp.gt.f32.partialorder %v358, 0.0
    %vm425 = vcmp.gt.f32.partialorder %v361, 0.0
    %vm426 = vcmp.gt.f32.partialorder %v366, 0.0
    %vm427 = vcmp.gt.f32.partialorder %v369, 0.0
    %vm428 = vcmp.gt.f32.partialorder %v374, 0.0
    %vm429 = vcmp.gt.f32.partialorder %v377, 0.0
    %vm430 = vcmp.gt.f32.partialorder %v382, 0.0
    %vm431 = vcmp.gt.f32.partialorder %v385, 0.0
    %vm432 = vcmp.gt.f32.partialorder %v390, 0.0
    %vm433 = vcmp.gt.f32.partialorder %v393, 0.0
    %vm434 = vcmp.gt.f32.partialorder %v398, 0.0
    %vm435 = vcmp.gt.f32.partialorder %v401, 0.0
    %v436 = vmul.f32 %v278, 0.01
    %v437 = vmul.f32 %v281, 0.01
    %v438 = vmul.f32 %v286, 0.01
    %v439 = vmul.f32 %v289, 0.01
    %v440 = vmul.f32 %v294, 0.01
    %v441 = vmul.f32 %v297, 0.01
    %v442 = vmul.f32 %v302, 0.01
    %v443 = vmul.f32 %v305, 0.01
    %v444 = vmul.f32 %v310, 0.01
    %v445 = vmul.f32 %v313, 0.01
    %v446 = vmul.f32 %v318, 0.01
    %v447 = vmul.f32 %v321, 0.01
    %v448 = vmul.f32 %v326, 0.01
    %v449 = vmul.f32 %v329, 0.01
    %v450 = vmul.f32 %v334, 0.01
    %v451 = vmul.f32 %v337, 0.01
    %v452 = vmul.f32 %v342, 0.01
    %v453 = vmul.f32 %v345, 0.01
    %v454 = vmul.f32 %v350, 0.01
    %v455 = vmul.f32 %v353, 0.01
    %v456 = vmul.f32 %v358, 0.01
    %v457 = vmul.f32 %v361, 0.01
    %v458 = vmul.f32 %v366, 0.01
    %v459 = vmul.f32 %v369, 0.01
    %v460 = vmul.f32 %v374, 0.01
    %v461 = vmul.f32 %v377, 0.01
    %v462 = vmul.f32 %v382, 0.01
    %v463 = vmul.f32 %v385, 0.01
    %v464 = vmul.f32 %v390, 0.01
    %v465 = vmul.f32 %v393, 0.01
    %v466 = vmul.f32 %v398, 0.01
    %v467 = vmul.f32 %v401, 0.01
    %v468 = vsel %vm404, %v278, %v436
    %v469 = vsel %vm405, %v281, %v437
    %v470 = vsel %vm406, %v286, %v438
    %v471 = vsel %vm407, %v289, %v439
    %v472 = vsel %vm408, %v294, %v440
    %v473 = vsel %vm409, %v297, %v441
    %v474 = vsel %vm410, %v302, %v442
    %v475 = vsel %vm411, %v305, %v443
    %v476 = vsel %vm412, %v310, %v444
    %v477 = vsel %vm413, %v313, %v445
    %v478 = vsel %vm414, %v318, %v446
    %v479 = vsel %vm415, %v321, %v447
    %v480 = vsel %vm416, %v326, %v448
    %v481 = vsel %vm417, %v329, %v449
    %v482 = vsel %vm418, %v334, %v450
    %v483 = vsel %vm419, %v337, %v451
    %v484 = vsel %vm420, %v342, %v452
    %v485 = vsel %vm421, %v345, %v453
    %v486 = vsel %vm422, %v350, %v454
    %v487 = vsel %vm423, %v353, %v455
    %v488 = vsel %vm424, %v358, %v456
    %v489 = vsel %vm425, %v361, %v457
    %v490 = vsel %vm426, %v366, %v458
    %v491 = vsel %vm427, %v369, %v459
    %v492 = vsel %vm428, %v374, %v460
    %v493 = vsel %vm429, %v377, %v461
    %v494 = vsel %vm430, %v382, %v462
    %v495 = vsel %vm431, %v385, %v463
    %v496 = vsel %vm432, %v390, %v464
    %v497 = vsel %vm433, %v393, %v465
    %v498 = vsel %vm434, %v398, %v466
    %v499 = vsel %vm435, %v401, %v467
    %v500 = vpack.c.bf16 %v469, %v468
    %v501 = vpack.c.bf16 %v471, %v470
    %v502 = vpack.c.bf16 %v473, %v472
    %v503 = vpack.c.bf16 %v475, %v474
    %v504 = vpack.c.bf16 %v477, %v476
    %v505 = vpack.c.bf16 %v479, %v478
    %v506 = vpack.c.bf16 %v481, %v480
    %v507 = vpack.c.bf16 %v483, %v482
    %v508 = vpack.c.bf16 %v485, %v484
    %v509 = vpack.c.bf16 %v487, %v486
    %v510 = vpack.c.bf16 %v489, %v488
    %v511 = vpack.c.bf16 %v491, %v490
    %v512 = vpack.c.bf16 %v493, %v492
    %v513 = vpack.c.bf16 %v495, %v494
    %v514 = vpack.c.bf16 %v497, %v496
    %v515 = vpack.c.bf16 %v499, %v498
    %s516 = scalar_lea.vmem [#allocation5], 64
    %v517 = vld [vmem:[%s516] sm:$0xf]
    %v518 = vld [vmem:[%s516 + $0x4] sm:$0xf]
    %v519 = vld [vmem:[%s516 + $0x8] sm:$0xf]
    %v520 = vld [vmem:[%s516 + $0xc] sm:$0xf]
    %v521 = vld [vmem:[%s516 + $0x10] sm:$0xf]
    %v522 = vld [vmem:[%s516 + $0x14] sm:$0xf]
    %v523 = vld [vmem:[%s516 + $0x18] sm:$0xf]
    %v524 = vld [vmem:[%s516 + $0x1c] sm:$0xf]
    %v525 = vld [vmem:[%s516 + $0x20] sm:$0xf]
    %v526 = vld [vmem:[%s516 + $0x24] sm:$0xf]
    %v527 = vld [vmem:[%s516 + $0x28] sm:$0xf]
    %v528 = vld [vmem:[%s516 + $0x2c] sm:$0xf]
    %v529 = vld [vmem:[%s516 + $0x30] sm:$0xf]
    %v530 = vld [vmem:[%s516 + $0x34] sm:$0xf]
    %v531 = vld [vmem:[%s516 + $0x38] sm:$0xf]
    %v532 = vld [vmem:[%s516 + $0x3c] sm:$0xf]
    %s533 = scalar_lea.vmem %s2, 1
    %v534 = vld [vmem:[%s533] sm:$0x1]
    %v536 = vlaneseq
    %v537 = vshrl.u32 %v536, 7
    %v538 = vsub.s32 0, %v537
    %v539 = vrot.slane %v534, %v538
    %v557 = vunpack.c.l.b16 %v517
    %v558 = vunpack.c.l.b16 %v518
    %v559 = vunpack.c.l.b16 %v519
    %v560 = vunpack.c.l.b16 %v520
    %v561 = vunpack.c.l.b16 %v521
    %v562 = vunpack.c.l.b16 %v522
    %v563 = vunpack.c.l.b16 %v523
    %v564 = vunpack.c.l.b16 %v524
    %v565 = vunpack.c.l.b16 %v525
    %v566 = vunpack.c.l.b16 %v526
    %v567 = vunpack.c.l.b16 %v527
    %v568 = vunpack.c.l.b16 %v528
    %v569 = vunpack.c.l.b16 %v529
    %v570 = vunpack.c.l.b16 %v530
    %v571 = vunpack.c.l.b16 %v531
    %v572 = vunpack.c.l.b16 %v532
    %v573 = vpack.c.b16 %v558, %v557
    %v574 = vpack.c.b16 %v560, %v559
    %v575 = vpack.c.b16 %v562, %v561
    %v576 = vpack.c.b16 %v564, %v563
    %v577 = vpack.c.b16 %v566, %v565
    %v578 = vpack.c.b16 %v568, %v567
    %v579 = vpack.c.b16 %v570, %v569
    %v580 = vpack.c.b16 %v572, %v571
    %589 = vmatprep.subr.bf16.mxu0 0
    %590 = vmatpush1.bf16.msra.mxu0 %v573
    %591 = vmatprep.subr.bf16.mxu0 0
    %592 = vmatpush1.bf16.msra.mxu0 %v574
    %593 = vmatprep.subr.bf16.mxu0 0
    %594 = vmatpush1.bf16.msra.mxu0 %v575
    %595 = vmatprep.subr.bf16.mxu0 0
    %596 = vmatpush1.bf16.msra.mxu0 %v576
    %597 = vmatprep.subr.bf16.mxu0 0
    %598 = vmatpush1.bf16.msra.mxu0 %v577
    %599 = vmatprep.subr.bf16.mxu0 0
    %600 = vmatpush1.bf16.msra.mxu0 %v578
    %601 = vmatprep.subr.bf16.mxu0 0
    %602 = vmatpush1.bf16.msra.mxu0 %v579
    %603 = vmatprep.subr.bf16.mxu0 0
    %604 = vmatpush1.bf16.msra.mxu0 %v580
    %605 = vmatprep.subr.bf16.mxu0 0
    %606 = vmatpush1.bf16.msra.mxu0 0
    %607 = vmatprep.subr.bf16.mxu0 0
    %608 = vmatpush1.bf16.msra.mxu0 0
    %609 = vmatprep.subr.bf16.mxu0 0
    %610 = vmatpush1.bf16.msra.mxu0 0
    %611 = vmatprep.subr.bf16.mxu0 0
    %612 = vmatpush1.bf16.msra.mxu0 0
    %613 = vmatprep.subr.bf16.mxu0 0
    %614 = vmatpush1.bf16.msra.mxu0 0
    %615 = vmatprep.subr.bf16.mxu0 0
    %616 = vmatpush1.bf16.msra.mxu0 0
    %617 = vmatprep.subr.bf16.mxu0 0
    %618 = vmatpush1.bf16.msra.mxu0 0
    %619 = vmatprep.subr.bf16.mxu0 0
    %620 = vmatpush1.bf16.msra.mxu0 0
    %621 = vmatprep.mubr.bf16.mxu0 0
    %622 = vmatmul.mubr.bf16.gmra.mrb[0].mxu0 %v500
    %v623 = vpop.f32.mrb[0].mxu0
    %v624 = vadd.f32 %v539, %v623
    %v625 = vpop.f32.mrb[0].mxu0
    %v626 = vpop.f32.mrb[0].mxu0
    %v627 = vadd.f32 %v539, %v626
    %v628 = vpop.f32.mrb[0].mxu0
    %629 = vmatprep.mubr.bf16.mxu0 0
    %630 = vmatmul.mubr.bf16.gmra.mrb[0].mxu0 %v501
    %v631 = vpop.f32.mrb[0].mxu0
    %v632 = vadd.f32 %v539, %v631
    %v633 = vpop.f32.mrb[0].mxu0
    %v634 = vpop.f32.mrb[0].mxu0
    %v635 = vadd.f32 %v539, %v634
    %v636 = vpop.f32.mrb[0].mxu0
    %637 = vmatprep.mubr.bf16.mxu0 0
    %638 = vmatmul.mubr.bf16.gmra.mrb[0].mxu0 %v502
    %v639 = vpop.f32.mrb[0].mxu0
    %v640 = vadd.f32 %v539, %v639
    %v641 = vpop.f32.mrb[0].mxu0
    %v642 = vpop.f32.mrb[0].mxu0
    %v643 = vadd.f32 %v539, %v642
    %v644 = vpop.f32.mrb[0].mxu0
    %645 = vmatprep.mubr.bf16.mxu0 0
    %646 = vmatmul.mubr.bf16.gmra.mrb[0].mxu0 %v503
    %v647 = vpop.f32.mrb[0].mxu0
    %v648 = vadd.f32 %v539, %v647
    %v649 = vpop.f32.mrb[0].mxu0
    %v650 = vpop.f32.mrb[0].mxu0
    %v651 = vadd.f32 %v539, %v650
    %v652 = vpop.f32.mrb[0].mxu0
    %653 = vmatprep.mubr.bf16.mxu0 0
    %654 = vmatmul.mubr.bf16.gmra.mrb[0].mxu0 %v504
    %v655 = vpop.f32.mrb[0].mxu0
    %v656 = vadd.f32 %v539, %v655
    %v657 = vpop.f32.mrb[0].mxu0
    %v658 = vpop.f32.mrb[0].mxu0
    %v659 = vadd.f32 %v539, %v658
    %v660 = vpop.f32.mrb[0].mxu0
    %661 = vmatprep.mubr.bf16.mxu0 0
    %662 = vmatmul.mubr.bf16.gmra.mrb[0].mxu0 %v505
    %v663 = vpop.f32.mrb[0].mxu0
    %v664 = vadd.f32 %v539, %v663
    %v665 = vpop.f32.mrb[0].mxu0
    %v666 = vpop.f32.mrb[0].mxu0
    %v667 = vadd.f32 %v539, %v666
    %v668 = vpop.f32.mrb[0].mxu0
    %669 = vmatprep.mubr.bf16.mxu0 0
    %670 = vmatmul.mubr.bf16.gmra.mrb[0].mxu0 %v506
    %v671 = vpop.f32.mrb[0].mxu0
    %v672 = vadd.f32 %v539, %v671
    %v673 = vpop.f32.mrb[0].mxu0
    %v674 = vpop.f32.mrb[0].mxu0
    %v675 = vadd.f32 %v539, %v674
    %v676 = vpop.f32.mrb[0].mxu0
    %677 = vmatprep.mubr.bf16.mxu0 0
    %678 = vmatmul.mubr.bf16.gmra.mrb[0].mxu0 %v507
    %v679 = vpop.f32.mrb[0].mxu0
    %v680 = vadd.f32 %v539, %v679
    %v681 = vpop.f32.mrb[0].mxu0
    %v682 = vpop.f32.mrb[0].mxu0
    %v683 = vadd.f32 %v539, %v682
    %v684 = vpop.f32.mrb[0].mxu0
    %685 = vmatprep.mubr.bf16.mxu0 0
    %686 = vmatmul.mubr.bf16.gmra.mrb[0].mxu0 %v508
    %v687 = vpop.f32.mrb[0].mxu0
    %v688 = vadd.f32 %v539, %v687
    %v689 = vpop.f32.mrb[0].mxu0
    %v690 = vpop.f32.mrb[0].mxu0
    %v691 = vadd.f32 %v539, %v690
    %v692 = vpop.f32.mrb[0].mxu0
    %693 = vmatprep.mubr.bf16.mxu0 0
    %694 = vmatmul.mubr.bf16.gmra.mrb[0].mxu0 %v509
    %v695 = vpop.f32.mrb[0].mxu0
    %v696 = vadd.f32 %v539, %v695
    %v697 = vpop.f32.mrb[0].mxu0
    %v698 = vpop.f32.mrb[0].mxu0
    %v699 = vadd.f32 %v539, %v698
    %v700 = vpop.f32.mrb[0].mxu0
    %701 = vmatprep.mubr.bf16.mxu0 0
    %702 = vmatmul.mubr.bf16.gmra.mrb[0].mxu0 %v510
    %v703 = vpop.f32.mrb[0].mxu0
    %v704 = vadd.f32 %v539, %v703
    %v705 = vpop.f32.mrb[0].mxu0
    %v706 = vpop.f32.mrb[0].mxu0
    %v707 = vadd.f32 %v539, %v706
    %v708 = vpop.f32.mrb[0].mxu0
    %709 = vmatprep.mubr.bf16.mxu0 0
    %710 = vmatmul.mubr.bf16.gmra.mrb[0].mxu0 %v511
    %v711 = vpop.f32.mrb[0].mxu0
    %v712 = vadd.f32 %v539, %v711
    %v713 = vpop.f32.mrb[0].mxu0
    %v714 = vpop.f32.mrb[0].mxu0
    %v715 = vadd.f32 %v539, %v714
    %v716 = vpop.f32.mrb[0].mxu0
    %717 = vmatprep.mubr.bf16.mxu0 0
    %718 = vmatmul.mubr.bf16.gmra.mrb[0].mxu0 %v512
    %v719 = vpop.f32.mrb[0].mxu0
    %v720 = vadd.f32 %v539, %v719
    %v721 = vpop.f32.mrb[0].mxu0
    %v722 = vpop.f32.mrb[0].mxu0
    %v723 = vadd.f32 %v539, %v722
    %v724 = vpop.f32.mrb[0].mxu0
    %725 = vmatprep.mubr.bf16.mxu0 0
    %726 = vmatmul.mubr.bf16.gmra.mrb[0].mxu0 %v513
    %v727 = vpop.f32.mrb[0].mxu0
    %v728 = vadd.f32 %v539, %v727
    %v729 = vpop.f32.mrb[0].mxu0
    %v730 = vpop.f32.mrb[0].mxu0
    %v731 = vadd.f32 %v539, %v730
    %v732 = vpop.f32.mrb[0].mxu0
    %733 = vmatprep.mubr.bf16.mxu0 0
    %734 = vmatmul.mubr.bf16.gmra.mrb[0].mxu0 %v514
    %v735 = vpop.f32.mrb[0].mxu0
    %v736 = vadd.f32 %v539, %v735
    %v737 = vpop.f32.mrb[0].mxu0
    %v738 = vpop.f32.mrb[0].mxu0
    %v739 = vadd.f32 %v539, %v738
    %v740 = vpop.f32.mrb[0].mxu0
    %741 = vmatprep.mubr.bf16.mxu0 0
    %742 = vmatmul.mubr.bf16.gmra.mrb[0].mxu0 %v515
    %v743 = vpop.f32.mrb[0].mxu0
    %v744 = vadd.f32 %v539, %v743
    %v745 = vpop.f32.mrb[0].mxu0
    %v746 = vpop.f32.mrb[0].mxu0
    %v747 = vadd.f32 %v539, %v746
    %v748 = vpop.f32.mrb[0].mxu0
    %749 = vdwg.mxu0
    %vm750 = vcmp.gt.f32.partialorder %v624, 0.0
    %vm751 = vcmp.gt.f32.partialorder %v627, 0.0
    %vm752 = vcmp.gt.f32.partialorder %v632, 0.0
    %vm753 = vcmp.gt.f32.partialorder %v635, 0.0
    %vm754 = vcmp.gt.f32.partialorder %v640, 0.0
    %vm755 = vcmp.gt.f32.partialorder %v643, 0.0
    %vm756 = vcmp.gt.f32.partialorder %v648, 0.0
    %vm757 = vcmp.gt.f32.partialorder %v651, 0.0
    %vm758 = vcmp.gt.f32.partialorder %v656, 0.0
    %vm759 = vcmp.gt.f32.partialorder %v659, 0.0
    %vm760 = vcmp.gt.f32.partialorder %v664, 0.0
    %vm761 = vcmp.gt.f32.partialorder %v667, 0.0
    %vm762 = vcmp.gt.f32.partialorder %v672, 0.0
    %vm763 = vcmp.gt.f32.partialorder %v675, 0.0
    %vm764 = vcmp.gt.f32.partialorder %v680, 0.0
    %vm765 = vcmp.gt.f32.partialorder %v683, 0.0
    %vm766 = vcmp.gt.f32.partialorder %v688, 0.0
    %vm767 = vcmp.gt.f32.partialorder %v691, 0.0
    %vm768 = vcmp.gt.f32.partialorder %v696, 0.0
    %vm769 = vcmp.gt.f32.partialorder %v699, 0.0
    %vm770 = vcmp.gt.f32.partialorder %v704, 0.0
    %vm771 = vcmp.gt.f32.partialorder %v707, 0.0
    %vm772 = vcmp.gt.f32.partialorder %v712, 0.0
    %vm773 = vcmp.gt.f32.partialorder %v715, 0.0
    %vm774 = vcmp.gt.f32.partialorder %v720, 0.0
    %vm775 = vcmp.gt.f32.partialorder %v723, 0.0
    %vm776 = vcmp.gt.f32.partialorder %v728, 0.0
    %vm777 = vcmp.gt.f32.partialorder %v731, 0.0
    %vm778 = vcmp.gt.f32.partialorder %v736, 0.0
    %vm779 = vcmp.gt.f32.partialorder %v739, 0.0
    %vm780 = vcmp.gt.f32.partialorder %v744, 0.0
    %vm781 = vcmp.gt.f32.partialorder %v747, 0.0
    %v782 = vmul.f32 %v624, 0.01
    %v783 = vmul.f32 %v627, 0.01
    %v784 = vmul.f32 %v632, 0.01
    %v785 = vmul.f32 %v635, 0.01
    %v786 = vmul.f32 %v640, 0.01
    %v787 = vmul.f32 %v643, 0.01
    %v788 = vmul.f32 %v648, 0.01
    %v789 = vmul.f32 %v651, 0.01
    %v790 = vmul.f32 %v656, 0.01
    %v791 = vmul.f32 %v659, 0.01
    %v792 = vmul.f32 %v664, 0.01
    %v793 = vmul.f32 %v667, 0.01
    %v794 = vmul.f32 %v672, 0.01
    %v795 = vmul.f32 %v675, 0.01
    %v796 = vmul.f32 %v680, 0.01
    %v797 = vmul.f32 %v683, 0.01
    %v798 = vmul.f32 %v688, 0.01
    %v799 = vmul.f32 %v691, 0.01
    %v800 = vmul.f32 %v696, 0.01
    %v801 = vmul.f32 %v699, 0.01
    %v802 = vmul.f32 %v704, 0.01
    %v803 = vmul.f32 %v707, 0.01
    %v804 = vmul.f32 %v712, 0.01
    %v805 = vmul.f32 %v715, 0.01
    %v806 = vmul.f32 %v720, 0.01
    %v807 = vmul.f32 %v723, 0.01
    %v808 = vmul.f32 %v728, 0.01
    %v809 = vmul.f32 %v731, 0.01
    %v810 = vmul.f32 %v736, 0.01
    %v811 = vmul.f32 %v739, 0.01
    %v812 = vmul.f32 %v744, 0.01
    %v813 = vmul.f32 %v747, 0.01
    %v814 = vsel %vm750, %v624, %v782
    %v815 = vsel %vm751, %v627, %v783
    %v816 = vsel %vm752, %v632, %v784
    %v817 = vsel %vm753, %v635, %v785
    %v818 = vsel %vm754, %v640, %v786
    %v819 = vsel %vm755, %v643, %v787
    %v820 = vsel %vm756, %v648, %v788
    %v821 = vsel %vm757, %v651, %v789
    %v822 = vsel %vm758, %v656, %v790
    %v823 = vsel %vm759, %v659, %v791
    %v824 = vsel %vm760, %v664, %v792
    %v825 = vsel %vm761, %v667, %v793
    %v826 = vsel %vm762, %v672, %v794
    %v827 = vsel %vm763, %v675, %v795
    %v828 = vsel %vm764, %v680, %v796
    %v829 = vsel %vm765, %v683, %v797
    %v830 = vsel %vm766, %v688, %v798
    %v831 = vsel %vm767, %v691, %v799
    %v832 = vsel %vm768, %v696, %v800
    %v833 = vsel %vm769, %v699, %v801
    %v834 = vsel %vm770, %v704, %v802
    %v835 = vsel %vm771, %v707, %v803
    %v836 = vsel %vm772, %v712, %v804
    %v837 = vsel %vm773, %v715, %v805
    %v838 = vsel %vm774, %v720, %v806
    %v839 = vsel %vm775, %v723, %v807
    %v840 = vsel %vm776, %v728, %v808
    %v841 = vsel %vm777, %v731, %v809
    %v842 = vsel %vm778, %v736, %v810
    %v843 = vsel %vm779, %v739, %v811
    %v844 = vsel %vm780, %v744, %v812
    %v845 = vsel %vm781, %v747, %v813
    %v846 = vpack.c.bf16 %v815, %v814
    %v847 = vpack.c.bf16 %v817, %v816
    %v848 = vpack.c.bf16 %v819, %v818
    %v849 = vpack.c.bf16 %v821, %v820
    %v850 = vpack.c.bf16 %v823, %v822
    %v851 = vpack.c.bf16 %v825, %v824
    %v852 = vpack.c.bf16 %v827, %v826
    %v853 = vpack.c.bf16 %v829, %v828
    %v854 = vpack.c.bf16 %v831, %v830
    %v855 = vpack.c.bf16 %v833, %v832
    %v856 = vpack.c.bf16 %v835, %v834
    %v857 = vpack.c.bf16 %v837, %v836
    %v858 = vpack.c.bf16 %v839, %v838
    %v859 = vpack.c.bf16 %v841, %v840
    %v860 = vpack.c.bf16 %v843, %v842
    %v861 = vpack.c.bf16 %v845, %v844
    %s862 = scalar_lea.vmem [#allocation5], 128
    %v863 = vld [vmem:[%s862] sm:$0xf]
    %v864 = vld [vmem:[%s862 + $0x4] sm:$0xf]
    %v865 = vld [vmem:[%s862 + $0x8] sm:$0xf]
    %v866 = vld [vmem:[%s862 + $0xc] sm:$0xf]
    %v867 = vld [vmem:[%s862 + $0x10] sm:$0xf]
    %v868 = vld [vmem:[%s862 + $0x14] sm:$0xf]
    %v869 = vld [vmem:[%s862 + $0x18] sm:$0xf]
    %v870 = vld [vmem:[%s862 + $0x1c] sm:$0xf]
    %v871 = vld [vmem:[%s862 + $0x20] sm:$0xf]
    %v872 = vld [vmem:[%s862 + $0x24] sm:$0xf]
    %v873 = vld [vmem:[%s862 + $0x28] sm:$0xf]
    %v874 = vld [vmem:[%s862 + $0x2c] sm:$0xf]
    %v875 = vld [vmem:[%s862 + $0x30] sm:$0xf]
    %v876 = vld [vmem:[%s862 + $0x34] sm:$0xf]
    %v877 = vld [vmem:[%s862 + $0x38] sm:$0xf]
    %v878 = vld [vmem:[%s862 + $0x3c] sm:$0xf]
    %s879 = scalar_lea.vmem %s2, 2
    %v880 = vld [vmem:[%s879] sm:$0x1]
    %v882 = vlaneseq
    %v883 = vshrl.u32 %v882, 7
    %v884 = vsub.s32 0, %v883
    %v885 = vrot.slane %v880, %v884
    %v903 = vunpack.c.l.b16 %v863
    %v904 = vunpack.c.l.b16 %v864
    %v905 = vunpack.c.l.b16 %v865
    %v906 = vunpack.c.l.b16 %v866
    %v907 = vunpack.c.l.b16 %v867
    %v908 = vunpack.c.l.b16 %v868
    %v909 = vunpack.c.l.b16 %v869
    %v910 = vunpack.c.l.b16 %v870
    %v911 = vunpack.c.l.b16 %v871
    %v912 = vunpack.c.l.b16 %v872
    %v913 = vunpack.c.l.b16 %v873
    %v914 = vunpack.c.l.b16 %v874
    %v915 = vunpack.c.l.b16 %v875
    %v916 = vunpack.c.l.b16 %v876
    %v917 = vunpack.c.l.b16 %v877
    %v918 = vunpack.c.l.b16 %v878
    %v919 = vpack.c.b16 %v904, %v903
    %v920 = vpack.c.b16 %v906, %v905
    %v921 = vpack.c.b16 %v908, %v907
    %v922 = vpack.c.b16 %v910, %v909
    %v923 = vpack.c.b16 %v912, %v911
    %v924 = vpack.c.b16 %v914, %v913
    %v925 = vpack.c.b16 %v916, %v915
    %v926 = vpack.c.b16 %v918, %v917
    %935 = vmatprep.subr.bf16.mxu0 0
    %936 = vmatpush1.bf16.msra.mxu0 %v919
    %937 = vmatprep.subr.bf16.mxu0 0
    %938 = vmatpush1.bf16.msra.mxu0 %v920
    %939 = vmatprep.subr.bf16.mxu0 0
    %940 = vmatpush1.bf16.msra.mxu0 %v921
    %941 = vmatprep.subr.bf16.mxu0 0
    %942 = vmatpush1.bf16.msra.mxu0 %v922
    %943 = vmatprep.subr.bf16.mxu0 0
    %944 = vmatpush1.bf16.msra.mxu0 %v923
    %945 = vmatprep.subr.bf16.mxu0 0
    %946 = vmatpush1.bf16.msra.mxu0 %v924
    %947 = vmatprep.subr.bf16.mxu0 0
    %948 = vmatpush1.bf16.msra.mxu0 %v925
    %949 = vmatprep.subr.bf16.mxu0 0
    %950 = vmatpush1.bf16.msra.mxu0 %v926
    %951 = vmatprep.subr.bf16.mxu0 0
    %952 = vmatpush1.bf16.msra.mxu0 0
    %953 = vmatprep.subr.bf16.mxu0 0
    %954 = vmatpush1.bf16.msra.mxu0 0
    %955 = vmatprep.subr.bf16.mxu0 0
    %956 = vmatpush1.bf16.msra.mxu0 0
    %957 = vmatprep.subr.bf16.mxu0 0
    %958 = vmatpush1.bf16.msra.mxu0 0
    %959 = vmatprep.subr.bf16.mxu0 0
    %960 = vmatpush1.bf16.msra.mxu0 0
    %961 = vmatprep.subr.bf16.mxu0 0
    %962 = vmatpush1.bf16.msra.mxu0 0
    %963 = vmatprep.subr.bf16.mxu0 0
    %964 = vmatpush1.bf16.msra.mxu0 0
    %965 = vmatprep.subr.bf16.mxu0 0
    %966 = vmatpush1.bf16.msra.mxu0 0
    %967 = vmatprep.mubr.bf16.mxu0 0
    %968 = vmatmul.mubr.bf16.gmra.mrb[0].mxu0 %v846
    %v969 = vpop.f32.mrb[0].mxu0
    %v970 = vadd.f32 %v885, %v969
    %v971 = vpop.f32.mrb[0].mxu0
    %v972 = vpop.f32.mrb[0].mxu0
    %v973 = vadd.f32 %v885, %v972
    %v974 = vpop.f32.mrb[0].mxu0
    %975 = vmatprep.mubr.bf16.mxu0 0
    %976 = vmatmul.mubr.bf16.gmra.mrb[0].mxu0 %v847
    %v977 = vpop.f32.mrb[0].mxu0
    %v978 = vadd.f32 %v885, %v977
    %v979 = vpop.f32.mrb[0].mxu0
    %v980 = vpop.f32.mrb[0].mxu0
    %v981 = vadd.f32 %v885, %v980
    %v982 = vpop.f32.mrb[0].mxu0
    %983 = vmatprep.mubr.bf16.mxu0 0
    %984 = vmatmul.mubr.bf16.gmra.mrb[0].mxu0 %v848
    %v985 = vpop.f32.mrb[0].mxu0
    %v986 = vadd.f32 %v885, %v985
    %v987 = vpop.f32.mrb[0].mxu0
    %v988 = vpop.f32.mrb[0].mxu0
    %v989 = vadd.f32 %v885, %v988
    %v990 = vpop.f32.mrb[0].mxu0
    %991 = vmatprep.mubr.bf16.mxu0 0
    %992 = vmatmul.mubr.bf16.gmra.mrb[0].mxu0 %v849
    %v993 = vpop.f32.mrb[0].mxu0
    %v994 = vadd.f32 %v885, %v993
    %v995 = vpop.f32.mrb[0].mxu0
    %v996 = vpop.f32.mrb[0].mxu0
    %v997 = vadd.f32 %v885, %v996
    %v998 = vpop.f32.mrb[0].mxu0
    %999 = vmatprep.mubr.bf16.mxu0 0
    %1000 = vmatmul.mubr.bf16.gmra.mrb[0].mxu0 %v850
    %v1001 = vpop.f32.mrb[0].mxu0
    %v1002 = vadd.f32 %v885, %v1001
    %v1003 = vpop.f32.mrb[0].mxu0
    %v1004 = vpop.f32.mrb[0].mxu0
    %v1005 = vadd.f32 %v885, %v1004
    %v1006 = vpop.f32.mrb[0].mxu0
    %1007 = vmatprep.mubr.bf16.mxu0 0
    %1008 = vmatmul.mubr.bf16.gmra.mrb[0].mxu0 %v851
    %v1009 = vpop.f32.mrb[0].mxu0
    %v1010 = vadd.f32 %v885, %v1009
    %v1011 = vpop.f32.mrb[0].mxu0
    %v1012 = vpop.f32.mrb[0].mxu0
    %v1013 = vadd.f32 %v885, %v1012
    %v1014 = vpop.f32.mrb[0].mxu0
    %1015 = vmatprep.mubr.bf16.mxu0 0
    %1016 = vmatmul.mubr.bf16.gmra.mrb[0].mxu0 %v852
    %v1017 = vpop.f32.mrb[0].mxu0
    %v1018 = vadd.f32 %v885, %v1017
    %v1019 = vpop.f32.mrb[0].mxu0
    %v1020 = vpop.f32.mrb[0].mxu0
    %v1021 = vadd.f32 %v885, %v1020
    %v1022 = vpop.f32.mrb[0].mxu0
    %1023 = vmatprep.mubr.bf16.mxu0 0
    %1024 = vmatmul.mubr.bf16.gmra.mrb[0].mxu0 %v853
    %v1025 = vpop.f32.mrb[0].mxu0
    %v1026 = vadd.f32 %v885, %v1025
    %v1027 = vpop.f32.mrb[0].mxu0
    %v1028 = vpop.f32.mrb[0].mxu0
    %v1029 = vadd.f32 %v885, %v1028
    %v1030 = vpop.f32.mrb[0].mxu0
    %1031 = vmatprep.mubr.bf16.mxu0 0
    %1032 = vmatmul.mubr.bf16.gmra.mrb[0].mxu0 %v854
    %v1033 = vpop.f32.mrb[0].mxu0
    %v1034 = vadd.f32 %v885, %v1033
    %v1035 = vpop.f32.mrb[0].mxu0
    %v1036 = vpop.f32.mrb[0].mxu0
    %v1037 = vadd.f32 %v885, %v1036
    %v1038 = vpop.f32.mrb[0].mxu0
    %1039 = vmatprep.mubr.bf16.mxu0 0
    %1040 = vmatmul.mubr.bf16.gmra.mrb[0].mxu0 %v855
    %v1041 = vpop.f32.mrb[0].mxu0
    %v1042 = vadd.f32 %v885, %v1041
    %v1043 = vpop.f32.mrb[0].mxu0
    %v1044 = vpop.f32.mrb[0].mxu0
    %v1045 = vadd.f32 %v885, %v1044
    %v1046 = vpop.f32.mrb[0].mxu0
    %1047 = vmatprep.mubr.bf16.mxu0 0
    %1048 = vmatmul.mubr.bf16.gmra.mrb[0].mxu0 %v856
    %v1049 = vpop.f32.mrb[0].mxu0
    %v1050 = vadd.f32 %v885, %v1049
    %v1051 = vpop.f32.mrb[0].mxu0
    %v1052 = vpop.f32.mrb[0].mxu0
    %v1053 = vadd.f32 %v885, %v1052
    %v1054 = vpop.f32.mrb[0].mxu0
    %1055 = vmatprep.mubr.bf16.mxu0 0
    %1056 = vmatmul.mubr.bf16.gmra.mrb[0].mxu0 %v857
    %v1057 = vpop.f32.mrb[0].mxu0
    %v1058 = vadd.f32 %v885, %v1057
    %v1059 = vpop.f32.mrb[0].mxu0
    %v1060 = vpop.f32.mrb[0].mxu0
    %v1061 = vadd.f32 %v885, %v1060
    %v1062 = vpop.f32.mrb[0].mxu0
    %1063 = vmatprep.mubr.bf16.mxu0 0
    %1064 = vmatmul.mubr.bf16.gmra.mrb[0].mxu0 %v858
    %v1065 = vpop.f32.mrb[0].mxu0
    %v1066 = vadd.f32 %v885, %v1065
    %v1067 = vpop.f32.mrb[0].mxu0
    %v1068 = vpop.f32.mrb[0].mxu0
    %v1069 = vadd.f32 %v885, %v1068
    %v1070 = vpop.f32.mrb[0].mxu0
    %1071 = vmatprep.mubr.bf16.mxu0 0
    %1072 = vmatmul.mubr.bf16.gmra.mrb[0].mxu0 %v859
    %v1073 = vpop.f32.mrb[0].mxu0
    %v1074 = vadd.f32 %v885, %v1073
    %v1075 = vpop.f32.mrb[0].mxu0
    %v1076 = vpop.f32.mrb[0].mxu0
    %v1077 = vadd.f32 %v885, %v1076
    %v1078 = vpop.f32.mrb[0].mxu0
    %1079 = vmatprep.mubr.bf16.mxu0 0
    %1080 = vmatmul.mubr.bf16.gmra.mrb[0].mxu0 %v860
    %v1081 = vpop.f32.mrb[0].mxu0
    %v1082 = vadd.f32 %v885, %v1081
    %v1083 = vpop.f32.mrb[0].mxu0
    %v1084 = vpop.f32.mrb[0].mxu0
    %v1085 = vadd.f32 %v885, %v1084
    %v1086 = vpop.f32.mrb[0].mxu0
    %1087 = vmatprep.mubr.bf16.mxu0 0
    %1088 = vmatmul.mubr.bf16.gmra.mrb[0].mxu0 %v861
    %v1089 = vpop.f32.mrb[0].mxu0
    %v1090 = vadd.f32 %v885, %v1089
    %v1091 = vpop.f32.mrb[0].mxu0
    %v1092 = vpop.f32.mrb[0].mxu0
    %v1093 = vadd.f32 %v885, %v1092
    %v1094 = vpop.f32.mrb[0].mxu0
    %1095 = vdwg.mxu0
    %1096 = vst [vmem:[#allocation7] sm:$0xff] %v970
    %1097 = vst [vmem:[#allocation7 + $0x8] sm:$0xff] %v973
    %1098 = vst [vmem:[#allocation7 + $0x10] sm:$0xff] %v978
    %1099 = vst [vmem:[#allocation7 + $0x18] sm:$0xff] %v981
    %1100 = vst [vmem:[#allocation7 + $0x20] sm:$0xff] %v986
    %1101 = vst [vmem:[#allocation7 + $0x28] sm:$0xff] %v989
    %1102 = vst [vmem:[#allocation7 + $0x30] sm:$0xff] %v994
    %1103 = vst [vmem:[#allocation7 + $0x38] sm:$0xff] %v997
    %1104 = vst [vmem:[#allocation7 + $0x40] sm:$0xff] %v1002
    %1105 = vst [vmem:[#allocation7 + $0x48] sm:$0xff] %v1005
    %1106 = vst [vmem:[#allocation7 + $0x50] sm:$0xff] %v1010
    %1107 = vst [vmem:[#allocation7 + $0x58] sm:$0xff] %v1013
    %1108 = vst [vmem:[#allocation7 + $0x60] sm:$0xff] %v1018
    %1109 = vst [vmem:[#allocation7 + $0x68] sm:$0xff] %v1021
    %1110 = vst [vmem:[#allocation7 + $0x70] sm:$0xff] %v1026
    %1111 = vst [vmem:[#allocation7 + $0x78] sm:$0xff] %v1029
    %1112 = vst [vmem:[#allocation7 + $0x80] sm:$0xff] %v1034
    %1113 = vst [vmem:[#allocation7 + $0x88] sm:$0xff] %v1037
    %1114 = vst [vmem:[#allocation7 + $0x90] sm:$0xff] %v1042
    %1115 = vst [vmem:[#allocation7 + $0x98] sm:$0xff] %v1045
    %1116 = vst [vmem:[#allocation7 + $0xa0] sm:$0xff] %v1050
    %1117 = vst [vmem:[#allocation7 + $0xa8] sm:$0xff] %v1053
    %1118 = vst [vmem:[#allocation7 + $0xb0] sm:$0xff] %v1058
    %1119 = vst [vmem:[#allocation7 + $0xb8] sm:$0xff] %v1061
    %1120 = vst [vmem:[#allocation7 + $0xc0] sm:$0xff] %v1066
    %1121 = vst [vmem:[#allocation7 + $0xc8] sm:$0xff] %v1069
    %1122 = vst [vmem:[#allocation7 + $0xd0] sm:$0xff] %v1074
    %1123 = vst [vmem:[#allocation7 + $0xd8] sm:$0xff] %v1077
    %1124 = vst [vmem:[#allocation7 + $0xe0] sm:$0xff] %v1082
    %1125 = vst [vmem:[#allocation7 + $0xe8] sm:$0xff] %v1085
    %1126 = vst [vmem:[#allocation7 + $0xf0] sm:$0xff] %v1090
    %1127 = vst [vmem:[#allocation7 + $0xf8] sm:$0xff] %v1093
    // Predicated region
    $region22: #{tpu_custom_call.1} parent=1 // pred_check
      _
    $region23: #{tpu_custom_call.1} parent=1 // pred_check_branch
      %1129 = sbr.rel (0) target = $region25
    $region24: #{tpu_custom_call.1} parent=1 // pred_region
      %s1131 = ssub.s32 4096, 4096
      %1132 = vsyncadd [#allocation4], %s1131
      %s1133 = sshll.u32 [#allocation7], 4
      %s1134 = int_to_ptr.vmem [resolvable:$true] %s1133
      %1139 = dma.vmem_to_hbm [thread:$0]  %s1134, 4096, %s3, [#allocation4], 128, 128, 8
    $region25: #{tpu_custom_call.1} parent=1 // pred_fallthru
      _
    // Predicated region
    $region26: #{tpu_custom_call.1} parent=1 // pred_check
      _
    $region27: #{tpu_custom_call.1} parent=1 // pred_check_branch
      %1141 = sbr.rel (0) target = $region29
    $region28: #{tpu_custom_call.1} parent=1 // pred_region
      %1142 = dma.done [#allocation4], 4096
    $region29: #{tpu_custom_call.1} parent=1 // pred_fallthru
      _
    %1143 = vsyncpa [#allocation3], 1
    %1144 = vsyncpa [#allocation6], 1
    %1145 = vsyncpa [#allocation4], 1

</llo_original>
